<compile_context>
chip_gen: v7x
topology: tpu7x:2x2x1
jax: 0.10.0
libtpu: 0.0.40
codegen_flags: <defaults>
</compile_context>

<pallas_src>
import functools

import jax
import jax.numpy as jnp
from jax.experimental import pallas as pl
from jax.experimental.pallas import tpu as pltpu


def _round_up(n, m):
    return ((n + m - 1) // m) * m


# --------------------------- Pass 1: per-class logZ over batch ---------------------------
def _logz_kernel(w_ref, b_ref, xt_ref, logz_ref, m_sc, l_sc, *, batch):
    i = pl.program_id(0)
    tb = xt_ref.shape[1]

    @pl.when(i == 0)
    def _():
        m_sc[...] = jnp.full_like(m_sc, -jnp.inf)
        l_sc[...] = jnp.zeros_like(l_sc)

    # h^T = W_eff @ x^T + b_eff   -> (6, TB), batch on the lane axis (no weight transpose).
    h = jnp.dot(w_ref[...], xt_ref[...], preferred_element_type=jnp.float32) + b_ref[...]

    # Mask columns that are batch padding so they don't pollute the batch-axis softmax.
    col = i * tb + jax.lax.broadcasted_iota(jnp.int32, h.shape, 1)
    valid = col < batch

    m_prev = m_sc[...]
    m_new = jnp.maximum(
        m_prev, jnp.max(jnp.where(valid, h, -jnp.inf), axis=-1, keepdims=True)
    )
    p = jnp.where(valid, jnp.exp(h - m_new), 0.0)
    l_sc[...] = l_sc[...] * jnp.exp(m_prev - m_new) + jnp.sum(p, axis=-1, keepdims=True)
    m_sc[...] = m_new

    @pl.when(i == pl.num_programs(0) - 1)
    def _():
        logz_ref[...] = m_sc[...] + jnp.log(l_sc[...])


# --------------------------- Pass 2: normalize (lane-dense stores) -----------------------
def _normalize_kernel(w_ref, b_ref, xt_ref, logz_ref, out_ref):
    h = jnp.dot(w_ref[...], xt_ref[...], preferred_element_type=jnp.float32) + b_ref[...]
    out_ref[...] = h - logz_ref[...]


def fold_params(params):
    """Collapse the purely-affine 3-layer chain into one (6,10) matmul + bias."""
    w1, b1, w2, b2, w3, b3 = params
    w_eff = w3 @ w2 @ w1                      # (6, 10)
    b_eff = w3 @ (w2 @ b1 + b2) + b3          # (6,)
    return w_eff.astype(jnp.float32), b_eff.reshape(6, 1).astype(jnp.float32)


def wm_private_forward(x, params, tile_b=None):
    B, F = x.shape
    assert F == 10
    w_eff, b_eff = fold_params(params)

    # Transposed, lane-dense layout: batch lives on the lane axis, padded to 128 multiple.
    if tile_b is None:
        tile_b = min(8192, _round_up(B, 128))   # modest tile: fits v5e/v7x scoped VMEM easily
    assert tile_b % 128 == 0
    b_pad = _round_up(B, tile_b)
    n_tiles = b_pad // tile_b

    xt = jnp.zeros((10, b_pad), jnp.float32).at[:, :B].set(x.T.astype(jnp.float32))

    full = lambda i: (0, 0)   # tiny weights/bias/logZ: same block every step (DMA once)
    tile = lambda i: (0, i)   # batch tiles

    w_spec = pl.BlockSpec((6, 10), full)
    b_spec = pl.BlockSpec((6, 1), full)
    x_spec = pl.BlockSpec((10, tile_b), tile)

    # Pass 1: logZ per class (reduction over batch -> "arbitrary" grid axis).
    logz = pl.pallas_call(
        functools.partial(_logz_kernel, batch=B),
        out_shape=jax.ShapeDtypeStruct((6, 1), jnp.float32),
        grid_spec=pltpu.PrefetchScalarGridSpec(
            num_scalar_prefetch=0,
            grid=(n_tiles,),
            in_specs=[w_spec, b_spec, x_spec],
            out_specs=pl.BlockSpec((6, 1), full),
            scratch_shapes=[pltpu.VMEM((6, 1), jnp.float32),
                            pltpu.VMEM((6, 1), jnp.float32)],
        ),
        compiler_params=pltpu.CompilerParams(dimension_semantics=("arbitrary",)),
        cost_estimate=pl.CostEstimate(
            flops=2 * b_pad * 10 * 6,
            transcendentals=6 * b_pad + 6,
            bytes_accessed=(10 * b_pad + 6 * 10 + 6 + 6) * 4,
        ),
    )(w_eff, b_eff, xt)

    # Pass 2: recompute logits per tile and normalize ("parallel" -> megacore shardable).
    out_t = pl.pallas_call(
        _normalize_kernel,
        out_shape=jax.ShapeDtypeStruct((6, b_pad), jnp.float32),
        grid_spec=pltpu.PrefetchScalarGridSpec(
            num_scalar_prefetch=0,
            grid=(n_tiles,),
            in_specs=[w_spec, b_spec, x_spec, pl.BlockSpec((6, 1), full)],
            out_specs=pl.BlockSpec((6, tile_b), tile),
        ),
        compiler_params=pltpu.CompilerParams(dimension_semantics=("parallel",)),
        cost_estimate=pl.CostEstimate(
            flops=2 * b_pad * 10 * 6,
            transcendentals=0,
            bytes_accessed=(10 * b_pad + 6 * b_pad + 6 * 10 + 6 + 6) * 4,
        ),
    )(w_eff, b_eff, xt, logz)

    return out_t[:, :B].T  # back to PyTorch layout (B, 6)


# ----------------------------------- test scaffolding -----------------------------------
def init_params(key):
    # PyTorch Linear shapes: weight (out,in), bias (out,)
    ks = jax.random.split(key, 6)

    def lin(kw, kb, out_f, in_f):
        bound = 1.0 / jnp.sqrt(in_f)
        w = jax.random.uniform(kw, (out_f, in_f), jnp.float32, -bound, bound)
        b = jax.random.uniform(kb, (out_f,), jnp.float32, -bound, bound)
        return w, b

    w1, b1 = lin(ks[0], ks[1], 20, 10)
    w2, b2 = lin(ks[2], ks[3], 10, 20)
    w3, b3 = lin(ks[4], ks[5], 6, 10)
    return (w1, b1, w2, b2, w3, b3)


def reference_forward(x, params):
    w1, b1, w2, b2, w3, b3 = params
    h = x @ w1.T + b1
    h = h @ w2.T + b2
    h = h @ w3.T + b3
    return jax.nn.log_softmax(h, axis=0)  # dim=0 (batch), matching the PyTorch module


if __name__ == "__main__":
    key = jax.random.PRNGKey(0)
    kx, kp = jax.random.split(key)
    params = init_params(kp)

    # Small case (matches the module's natural shapes): batch=8, in_features=10.
    x = jax.random.normal(kx, (8, 10), jnp.float32)
    out = jax.block_until_ready(wm_private_forward(x, params))
    ref = reference_forward(x, params)
    assert out.shape == (8, 6)
    assert jnp.allclose(out, ref, atol=1e-5, rtol=1e-4), "mismatch vs pure-JAX reference (B=8)"

    # Multi-tile + padding case: exercises the tiled two-pass batch-axis log-softmax.
    x2 = jax.random.normal(jax.random.PRNGKey(1), (300, 10), jnp.float32)
    out2 = jax.block_until_ready(wm_private_forward(x2, params, tile_b=128))
    ref2 = reference_forward(x2, params)
    assert out2.shape == (300, 6)
    assert jnp.allclose(out2, ref2, atol=1e-5, rtol=1e-4), "mismatch vs pure-JAX reference (B=300)"

    print("KERNEL_OK")
</pallas_src>

<mosaic_0001>
module attributes {stable_mosaic.version = 11 : i64} {
  func.func @_logz_kernel(%arg0: i32, %arg1: memref<6x10xf32, #tpu.memory_space<vmem>>, %arg2: memref<6x1xf32, #tpu.memory_space<vmem>>, %arg3: memref<10x128xf32, #tpu.memory_space<vmem>>, %arg4: memref<6x1xf32, #tpu.memory_space<vmem>>, %arg5: memref<6x1xf32, #tpu.memory_space<vmem>>, %arg6: memref<6x1xf32, #tpu.memory_space<vmem>>) attributes {dimension_semantics = [#tpu.dimension_semantics<arbitrary>], iteration_bounds = array<i64: 1>, scalar_prefetch = 0 : i64, scratch_operands = 2 : i64, tpu.core_type = #tpu.core_type<tc>, window_params = [{pipeline_mode = #tpu.pipeline_mode<synchronous>, transform_indices = @transform_0, window_bounds = array<i64: 6, 10>}, {pipeline_mode = #tpu.pipeline_mode<synchronous>, transform_indices = @transform_1, window_bounds = array<i64: 6, 1>}, {transform_indices = @transform_2, window_bounds = array<i64: 10, 128>}, {pipeline_mode = #tpu.pipeline_mode<synchronous>, transform_indices = @transform_3, window_bounds = array<i64: 6, 1>}]} {
    %c0_i32 = arith.constant 0 : i32
    %0 = arith.cmpi eq, %arg0, %c0_i32 : i32
    %1 = arith.extui %0 : i1 to i32
    %c0_i32_0 = arith.constant 0 : i32
    %2 = arith.cmpi ne, %1, %c0_i32_0 : i32
    scf.if %2 {
      %cst_20 = arith.constant 0xFF800000 : f32
      %38 = vector.broadcast %cst_20 : f32 to vector<6x1xf32>
      %c0_21 = arith.constant 0 : index
      %c0_22 = arith.constant 0 : index
      %39 = vector.load %arg5[%c0_21, %c0_22] : memref<6x1xf32, #tpu.memory_space<vmem>>, vector<6x1xf32>
      tpu.vector_store %arg5[%c0_21, %c0_22], %38 {strides = array<i32>} : memref<6x1xf32, #tpu.memory_space<vmem>>, vector<6x1xf32>,
      %cst_23 = arith.constant 0.000000e+00 : f32
      %40 = vector.broadcast %cst_23 : f32 to vector<6x1xf32>
      %c0_24 = arith.constant 0 : index
      %c0_25 = arith.constant 0 : index
      %41 = vector.load %arg6[%c0_24, %c0_25] : memref<6x1xf32, #tpu.memory_space<vmem>>, vector<6x1xf32>
      tpu.vector_store %arg6[%c0_24, %c0_25], %40 {strides = array<i32>} : memref<6x1xf32, #tpu.memory_space<vmem>>, vector<6x1xf32>,
    } else {
    }
    %c0 = arith.constant 0 : index
    %c0_1 = arith.constant 0 : index
    %3 = vector.load %arg1[%c0, %c0_1] : memref<6x10xf32, #tpu.memory_space<vmem>>, vector<6x10xf32>
    %c0_2 = arith.constant 0 : index
    %c0_3 = arith.constant 0 : index
    %4 = vector.load %arg3[%c0_2, %c0_3] : memref<10x128xf32, #tpu.memory_space<vmem>>, vector<10x128xf32>
    %cst = arith.constant dense<0.000000e+00> : vector<6x128xf32>
    %5 = tpu.matmul %3, %4, %cst {dimension_numbers = #tpu.dot_dimension_numbers<[1], [0], [0], [1], [0, 0, 1, 1], [], []>} : vector<6x10xf32>, vector<10x128xf32>, vector<6x128xf32> -> vector<6x128xf32>
    %c0_4 = arith.constant 0 : index
    %c0_5 = arith.constant 0 : index
    %6 = vector.load %arg2[%c0_4, %c0_5] : memref<6x1xf32, #tpu.memory_space<vmem>>, vector<6x1xf32>
    %7 = vector.broadcast %6 : vector<6x1xf32> to vector<6x128xf32>
    %8 = arith.addf %5, %7 : vector<6x128xf32>
    %c128_i32 = arith.constant 128 : i32
    %9 = arith.muli %arg0, %c128_i32 : i32
    %10 = tpu.iota {dimensions = array<i32: 1>} : vector<6x128xi32>
    %11 = vector.broadcast %9 : i32 to vector<6x128xi32>
    %12 = arith.addi %11, %10 : vector<6x128xi32>
    %c8_i32 = arith.constant 8 : i32
    %13 = vector.broadcast %c8_i32 : i32 to vector<6x128xi32>
    %14 = arith.cmpi slt, %12, %13 : vector<6x128xi32>
    %c0_6 = arith.constant 0 : index
    %c0_7 = arith.constant 0 : index
    %15 = vector.load %arg5[%c0_6, %c0_7] : memref<6x1xf32, #tpu.memory_space<vmem>>, vector<6x1xf32>
    %cst_8 = arith.constant 0xFF800000 : f32
    %16 = vector.broadcast %cst_8 : f32 to vector<6x128xf32>
    %17 = arith.select %14, %8, %16 : vector<6x128xi1>, vector<6x128xf32>
    %cst_9 = arith.constant dense<0xFF800000> : vector<6xf32>
    %18 = vector.multi_reduction <maximumf>, %17, %cst_9 [1] : vector<6x128xf32> to vector<6xf32>
    %19 = vector.shape_cast %18 : vector<6xf32> to vector<6x1xf32>
    %20 = arith.maximumf %15, %19 : vector<6x1xf32>
    %21 = vector.broadcast %20 : vector<6x1xf32> to vector<6x128xf32>
    %22 = arith.subf %8, %21 : vector<6x128xf32>
    %23 = math.exp %22 : vector<6x128xf32>
    %cst_10 = arith.constant 0.000000e+00 : f32
    %24 = vector.broadcast %cst_10 : f32 to vector<6x128xf32>
    %25 = arith.select %14, %23, %24 : vector<6x128xi1>, vector<6x128xf32>
    %c0_11 = arith.constant 0 : index
    %c0_12 = arith.constant 0 : index
    %26 = vector.load %arg6[%c0_11, %c0_12] : memref<6x1xf32, #tpu.memory_space<vmem>>, vector<6x1xf32>
    %27 = arith.subf %15, %20 : vector<6x1xf32>
    %28 = math.exp %27 : vector<6x1xf32>
    %29 = arith.mulf %26, %28 : vector<6x1xf32>
    %cst_13 = arith.constant dense<0.000000e+00> : vector<6xf32>
    %30 = vector.multi_reduction <add>, %25, %cst_13 [1] : vector<6x128xf32> to vector<6xf32>
    %31 = vector.shape_cast %30 : vector<6xf32> to vector<6x1xf32>
    %32 = arith.addf %29, %31 : vector<6x1xf32>
    %c0_14 = arith.constant 0 : index
    %c0_15 = arith.constant 0 : index
    %33 = vector.load %arg6[%c0_14, %c0_15] : memref<6x1xf32, #tpu.memory_space<vmem>>, vector<6x1xf32>
    tpu.vector_store %arg6[%c0_14, %c0_15], %32 {strides = array<i32>} : memref<6x1xf32, #tpu.memory_space<vmem>>, vector<6x1xf32>,
    %c0_16 = arith.constant 0 : index
    %c0_17 = arith.constant 0 : index
    %34 = vector.load %arg5[%c0_16, %c0_17] : memref<6x1xf32, #tpu.memory_space<vmem>>, vector<6x1xf32>
    tpu.vector_store %arg5[%c0_16, %c0_17], %20 {strides = array<i32>} : memref<6x1xf32, #tpu.memory_space<vmem>>, vector<6x1xf32>,
    %c0_i32_18 = arith.constant 0 : i32
    %35 = arith.cmpi eq, %arg0, %c0_i32_18 : i32
    %36 = arith.extui %35 : i1 to i32
    %c0_i32_19 = arith.constant 0 : i32
    %37 = arith.cmpi ne, %36, %c0_i32_19 : i32
    scf.if %37 {
      %c0_20 = arith.constant 0 : index
      %c0_21 = arith.constant 0 : index
      %38 = vector.load %arg5[%c0_20, %c0_21] : memref<6x1xf32, #tpu.memory_space<vmem>>, vector<6x1xf32>
      %c0_22 = arith.constant 0 : index
      %c0_23 = arith.constant 0 : index
      %39 = vector.load %arg6[%c0_22, %c0_23] : memref<6x1xf32, #tpu.memory_space<vmem>>, vector<6x1xf32>
      %40 = math.log %39 : vector<6x1xf32>
      %41 = arith.addf %38, %40 : vector<6x1xf32>
      %c0_24 = arith.constant 0 : index
      %c0_25 = arith.constant 0 : index
      %42 = vector.load %arg4[%c0_24, %c0_25] : memref<6x1xf32, #tpu.memory_space<vmem>>, vector<6x1xf32>
      tpu.vector_store %arg4[%c0_24, %c0_25], %41 {strides = array<i32>} : memref<6x1xf32, #tpu.memory_space<vmem>>, vector<6x1xf32>,
    } else {
    }
    return
  }
  func.func @transform_0(%arg0: i32) -> (i32, i32) {
    %c0_i32 = arith.constant 0 : i32
    %c0_i32_0 = arith.constant 0 : i32
    %c0_i32_1 = arith.constant 0 : i32
    return %c0_i32, %c0_i32_0 : i32, i32
  }
  func.func @transform_1(%arg0: i32) -> (i32, i32) {
    %c0_i32 = arith.constant 0 : i32
    %c0_i32_0 = arith.constant 0 : i32
    %c0_i32_1 = arith.constant 0 : i32
    return %c0_i32, %c0_i32_0 : i32, i32
  }
  func.func @transform_2(%arg0: i32) -> (i32, i32) {
    %c0_i32 = arith.constant 0 : i32
    %c0_i32_0 = arith.constant 0 : i32
    return %c0_i32, %arg0 : i32, i32
  }
  func.func @transform_3(%arg0: i32) -> (i32, i32) {
    %c0_i32 = arith.constant 0 : i32
    %c0_i32_0 = arith.constant 0 : i32
    %c0_i32_1 = arith.constant 0 : i32
    return %c0_i32, %c0_i32_0 : i32, i32
  }
}

</mosaic_0001>

<llo_original>
// kernel: tpu_custom_call.1
$region0: #{tpu_custom_call.1}
  #allocation0 [shape = 'u32[]', space=smem, size = 0x4, offset = 0x4, fixed_abs, tag = 'smem constant byte address 0x4 - core index']
  #allocation1 [shape = 'u32[144,128]{1,0:T(1,128)}', space=vmem, size = 0x12000, scoped, tag = 'internal scratch']
  #allocation2 [shape = 'f32[6,1]{1,0:T(8,128)}', space=vmem, size = 0x1000, scoped, tag = 'scratch operand']
  #allocation3 [shape = 'f32[6,1]{1,0:T(8,128)}', space=vmem, size = 0x1000, scoped, tag = 'scratch operand']
  %s0 = inlined_call_operand.hbm [shape: f32[6,10], index: 0, kind: input, shape index: {}]
  %s1 = inlined_call_operand.vmem [shape: f32[6,1], index: 1, kind: input, shape index: {}]
  %s2 = inlined_call_operand.vmem [shape: f32[10,128], index: 2, kind: input, shape index: {}]
  %s3 = inlined_call_operand.vmem [shape: f32[6,1], index: 3, kind: output, shape index: {}]
  %s4 = sld [smem:[#allocation0]]
  $region34: #{tpu_custom_call.1} parent=0
    _
  %s6 = ssub.s32 1, %s4
  %s7 = scalar_select 0, %s6, %s4
  $region1: #{tpu_custom_call.1} parent=0
    #allocation4 [shape = 'u8[4096]{0}', space=vmem, size = 0x1000, scoped, tag = 'input window, operand 0, single buffered']
    #allocation5 [shape = 's32[1]{0}', space=sflag, size = 0x4, scoped, tag = 'scoped memory for tpu_custom_call.1']
    %8 = vsyncpa [#allocation5], 0
    // Predicated region
    $region2: #{tpu_custom_call.1} parent=1 // pred_check
      _
    $region3: #{tpu_custom_call.1} parent=1 // pred_check_branch
      %10 = sbr.rel (0) target = $region5
    $region4: #{tpu_custom_call.1} parent=1 // pred_region
      %s12 = ssub.s32 128, 128
      %13 = vsyncadd [#allocation5], %s12
      %s15 = sshll.u32 [#allocation4], 4
      %s16 = int_to_ptr.vmem [resolvable:$true] %s15
      %18 = dma.hbm_to_vmem [thread:$0]  %s0, 128, %s16, [#allocation5]
    $region5: #{tpu_custom_call.1} parent=1 // pred_fallthru
      _
    // Predicated region
    $region6: #{tpu_custom_call.1} parent=1 // pred_check
      _
    $region7: #{tpu_custom_call.1} parent=1 // pred_check_branch
      %20 = sbr.rel (0) target = $region9
    $region8: #{tpu_custom_call.1} parent=1 // pred_region
      _
    $region9: #{tpu_custom_call.1} parent=1 // pred_fallthru
      _
    // Predicated region
    $region10: #{tpu_custom_call.1} parent=1 // pred_check
      _
    $region11: #{tpu_custom_call.1} parent=1 // pred_check_branch
      %22 = sbr.rel (0) target = $region13
    $region12: #{tpu_custom_call.1} parent=1 // pred_region
      _
    $region13: #{tpu_custom_call.1} parent=1 // pred_fallthru
      _
    // Predicated region
    $region14: #{tpu_custom_call.1} parent=1 // pred_check
      _
    $region15: #{tpu_custom_call.1} parent=1 // pred_check_branch
      %24 = sbr.rel (0) target = $region17
    $region16: #{tpu_custom_call.1} parent=1 // pred_region
      %25 = dma.done [#allocation5], 128
    $region17: #{tpu_custom_call.1} parent=1 // pred_fallthru
      _
    %p26 = scmp.eq.s32.totalorder 0, 0
    // Predicated region
    $region18: #{tpu_custom_call.1} parent=1 // pred_check
      %p27 = pneg %p26
    $region19: #{tpu_custom_call.1} parent=1 // pred_check_branch
      %29 = sbr.rel (%p27) target = $region21
    $region20: #{tpu_custom_call.1} parent=1 // pred_region
      %vm30 = vcmask 5120
      %31 = vst.msk [vmem:[#allocation2] sm:$0x3f] %vm30, -inf
      %32 = vst.msk [vmem:[#allocation3] sm:$0x3f] %vm30, 0.0
    $region21: #{tpu_custom_call.1} parent=1 // pred_fallthru
      _
    %v33 = vld [vmem:[#allocation4] sm:$0x3f]
    %v34 = vld [vmem:[%s2] sm:$0xff]
    %v35 = vld [vmem:[%s2 + $0x8] sm:$0x3]
    %v36 = vld [vmem:[%s1] sm:$0x3f]
    %38 = vset.pattern.permute.xlu0 0
    %39 = vperm.xlu0 %38, %v36
    %v40 = vpop.permute.xlu0 %39
    %vm42 = vcmask 80896
    %v44 = vsel %vm42, %v33, 0
    %vm46 = vcmask 1041408
    %v48 = vsel %vm46, %v35, 0
    %50 = vmatprep.subr.mxu0 0.0
    %51 = vmatpush1.msra.mxu0 %v34
    %52 = vmatprep.subr.mxu0 0.0
    %53 = vmatpush1.msra.mxu0 %v48
    %54 = vmatprep.subr.mxu0 0.0
    %55 = vmatpush1.msra.mxu0 0.0
    %56 = vmatprep.subr.mxu0 0.0
    %57 = vmatpush1.msra.mxu0 0.0
    %58 = vmatprep.subr.mxu0 0.0
    %59 = vmatpush1.msra.mxu0 0.0
    %60 = vmatprep.subr.mxu0 0.0
    %61 = vmatpush1.msra.mxu0 0.0
    %62 = vmatprep.subr.mxu0 0.0
    %63 = vmatpush1.msra.mxu0 0.0
    %64 = vmatprep.subr.mxu0 0.0
    %65 = vmatpush1.msra.mxu0 0.0
    %66 = vmatprep.subr.mxu0 0.0
    %67 = vmatpush1.msra.mxu0 0.0
    %68 = vmatprep.subr.mxu0 0.0
    %69 = vmatpush1.msra.mxu0 0.0
    %70 = vmatprep.subr.mxu0 0.0
    %71 = vmatpush1.msra.mxu0 0.0
    %72 = vmatprep.subr.mxu0 0.0
    %73 = vmatpush1.msra.mxu0 0.0
    %74 = vmatprep.subr.mxu0 0.0
    %75 = vmatpush1.msra.mxu0 0.0
    %76 = vmatprep.subr.mxu0 0.0
    %77 = vmatpush1.msra.mxu0 0.0
    %78 = vmatprep.subr.mxu0 0.0
    %79 = vmatpush1.msra.mxu0 0.0
    %80 = vmatprep.subr.mxu0 0.0
    %81 = vmatpush1.msra.mxu0 0.0
    %82 = vmatprep.subr.mxu0 0.0
    %83 = vmatpush1.msra.mxu0 0.0
    %84 = vmatprep.subr.mxu0 0.0
    %85 = vmatpush1.msra.mxu0 0.0
    %86 = vmatprep.subr.mxu0 0.0
    %87 = vmatpush1.msra.mxu0 0.0
    %88 = vmatprep.subr.mxu0 0.0
    %89 = vmatpush1.msra.mxu0 0.0
    %90 = vmatprep.subr.mxu0 0.0
    %91 = vmatpush1.msra.mxu0 0.0
    %92 = vmatprep.subr.mxu0 0.0
    %93 = vmatpush1.msra.mxu0 0.0
    %94 = vmatprep.subr.mxu0 0.0
    %95 = vmatpush1.msra.mxu0 0.0
    %96 = vmatprep.subr.mxu0 0.0
    %97 = vmatpush1.msra.mxu0 0.0
    %98 = vmatprep.subr.mxu0 0.0
    %99 = vmatpush1.msra.mxu0 0.0
    %100 = vmatprep.subr.mxu0 0.0
    %101 = vmatpush1.msra.mxu0 0.0
    %102 = vmatprep.subr.mxu0 0.0
    %103 = vmatpush1.msra.mxu0 0.0
    %104 = vmatprep.subr.mxu0 0.0
    %105 = vmatpush1.msra.mxu0 0.0
    %106 = vmatprep.subr.mxu0 0.0
    %107 = vmatpush1.msra.mxu0 0.0
    %108 = vmatprep.subr.mxu0 0.0
    %109 = vmatpush1.msra.mxu0 0.0
    %110 = vmatprep.subr.mxu0 0.0
    %111 = vmatpush1.msra.mxu0 0.0
    %112 = vmatprep.subr.mxu0 0.0
    %113 = vmatpush1.msra.mxu0 0.0
    %114 = vmatprep.mubr.f32.mxu0 0.0
    %115 = vmatmul.mubr.f32.gmra.mrb[0].mxu0 %v44
    %v116 = vpop.f32.mrb[0].mxu0
    %v117 = vadd.f32 %v40, %v116
    %v118 = vpop.f32.mrb[0].mxu0
    %119 = vdwg.mxu0
    %s120 = smul.u32 0, 128
    %v121 = vlaneseq
    %v122 = vand.u32 %v121, 127
    %v123 = vstv %s120
    %v124 = vadd.s32 %v123, %v122
    %vm125 = vcmp.lt.s32.totalorder %v124, 8
    %v126 = vld [vmem:[#allocation2] sm:$0x3f]
    %v127 = vsel %vm125, %v117, -inf
    %vm128 = vcmask 1045504
    %v129 = vsel %vm128, %v127, -inf
    %130 = vmax.xlane.f32.xlu0 %v129
    %v131 = vpop.xlane.xlu0 %130
    %v132 = vmax.f32 %v126, %v131
    %134 = vset.pattern.permute.xlu0 0
    %135 = vperm.xlu0 %134, %v132
    %v136 = vpop.permute.xlu0 %135
    %v138 = vsub.f32 %v117, %v136
    %v139 = vmul.f32 %v138, 1.442695
    %v140 = vpow.pop %v139
    %v141 = vsel %vm125, %v140, 0.0
    %v142 = vld [vmem:[#allocation3] sm:$0x3f]
    %v143 = vsub.f32 %v126, %v132
    %v144 = vmul.f32 %v143, 1.442695
    %v145 = vpow.pop %v144
    %v146 = vmul.f32 %v142, %v145
    %v147 = vsel %vm128, %v141, 0.0
    %148 = vadd.xlane.f32.xlu0 %v147
    %v149 = vpop.xlane.xlu0 %148
    %v150 = vadd.f32 %v146, %v149
    %vm151 = vcmask 5120
    %152 = vst.msk [vmem:[#allocation3] sm:$0x3f] %vm151, %v150
    %153 = vst.msk [vmem:[#allocation2] sm:$0x3f] %vm151, %v132
    // Predicated region
    $region22: #{tpu_custom_call.1} parent=1 // pred_check
      %p154 = pneg %p26
    $region23: #{tpu_custom_call.1} parent=1 // pred_check_branch
      %156 = sbr.rel (%p154) target = $region25
    $region24: #{tpu_custom_call.1} parent=1 // pred_region
      %v157 = vld [vmem:[#allocation2] sm:$0x3f]
      %v158 = vld [vmem:[#allocation3] sm:$0x3f]
      %v159 = vlog2.pop %v158
      %v160 = vmul.f32 %v159, 0.6931472
      %v161 = vadd.f32 %v157, %v160
      %162 = vst.msk [vmem:[%s3] sm:$0x3f] %vm151, %v161
    $region25: #{tpu_custom_call.1} parent=1 // pred_fallthru
      _
    // Predicated region
    $region26: #{tpu_custom_call.1} parent=1 // pred_check
      _
    $region27: #{tpu_custom_call.1} parent=1 // pred_check_branch
      %164 = sbr.rel (0) target = $region29
    $region28: #{tpu_custom_call.1} parent=1 // pred_region
      _
    $region29: #{tpu_custom_call.1} parent=1 // pred_fallthru
      _
    // Predicated region
    $region30: #{tpu_custom_call.1} parent=1 // pred_check
      _
    $region31: #{tpu_custom_call.1} parent=1 // pred_check_branch
      %166 = sbr.rel (0) target = $region33
    $region32: #{tpu_custom_call.1} parent=1 // pred_region
      _
    $region33: #{tpu_custom_call.1} parent=1 // pred_fallthru
      _
    %167 = vsyncpa [#allocation5], 1

</llo_original>
